<compile_context>
chip_gen: v6e
topology: v6e:2x2x1
jax: 0.10.0
libtpu: 0.0.40
codegen_flags: <defaults>
</compile_context>

<pallas_src>
import functools

import jax
import jax.numpy as jnp
from jax import lax
from jax.experimental import pallas as pl
from jax.experimental.pallas import tpu as pltpu


# ---------------------------------------------------------------------------
# Configuration
# ---------------------------------------------------------------------------
_TARGET_TILE_BYTES = 2 * 1024 * 1024   # ~2 MiB per input tile (v7x-safe)
_VMEM_LIMIT_BYTES = 32 * 1024 * 1024   # raise v5e's 16 MiB scoped default


def _round_up(x, m):
    return ((x + m - 1) // m) * m


def _num_tensorcores():
    """Best-effort TensorCores-per-JAX-device (2 on v7x / megacore v4 / v5p)."""
    try:
        kind = jax.devices()[0].device_kind.lower()
    except Exception:
        return 1
    if "v7" in kind or "7x" in kind:
        return 2
    if "v4" in kind and "lite" not in kind:
        return 2
    if "v5p" in kind:
        return 2
    if "v5" in kind and "lite" not in kind and "v5e" not in kind:
        return 2  # bare "TPU v5" == v5p (megacore)
    return 1      # v5e / v6e / unknown -> single TensorCore


def _choose_lane(C, H, W):
    """Pick a lane-dense last dim so flattening needs no padding.

    Returns (lane, rows, needs_pad).  When W % 128 == 0 the reshape is a pure
    major-dim merge (guaranteed free); otherwise a pad-free divisor reshape.
    """
    n = C * H * W
    if W % 128 == 0:
        return W, C * H, False
    for lane in (1024, 512, 256, 128):
        if n % lane == 0:
            return lane, n // lane, False
    # TODO(synk): mask the ragged lane tail in-kernel instead of this (rare,
    # < 128 extra elements/sample) pad; real images have C*H*W % 128 == 0.
    lane = 128
    return lane, _round_up(n, lane) // lane, True


def _prep(img, B, n, lane, rows, needs_pad):
    if not needs_pad:
        return img.reshape(B, rows, lane)
    flat = img.reshape(B, n)
    flat = jnp.pad(flat, ((0, 0), (0, rows * lane - n)))
    return flat.reshape(B, rows, lane)


# ---------------------------------------------------------------------------
# Kernel
# ---------------------------------------------------------------------------
def _hear_loss_kernel(same_ref, yhat_ref, x_ref, y_ref, acc_ref,
                      *, tr, acc_r, lane, cpc, rows, mask_rows):
    """Processes one (1, tr, lane) chunk of one sample per grid step.

    acc_ref is the kernel output block (1, 2, acc_r, lane), resident in VMEM
    across the (batch, chunk) reduction axes; one small slab per "core" index:
      acc[k, 0] : partial sums of same^2 * (X - Y)^2   (rec)
      acc[k, 1] : partial sums of |Y_hat - Y|          (chg)
    Each tile is folded to (acc_r, lane) with a VALU-only sublane-group sum, so
    per-step VMEM read/modify/write traffic is tiny and independent of tr.
    """
    k = pl.program_id(0)
    b = pl.program_id(1)
    c = pl.program_id(2)

    @pl.when((b == 0) & (c == 0))
    def _init():
        acc_ref[...] = jnp.zeros_like(acc_ref)

    # Per-sample mask scalar from SMEM: (X*s - Y*s)^2 == s^2 * (X - Y)^2.
    # (Bit-exact for same in {0, 1}; ULP-level only for fractional masks.)
    s = same_ref[b]
    w = s * s

    x = x_ref[0].astype(jnp.float32)        # (tr, lane)
    y = y_ref[0].astype(jnp.float32)
    yhat = yhat_ref[0].astype(jnp.float32)

    d = x - y
    rec = w * (d * d)
    chg = jnp.abs(yhat - y)

    if mask_rows:
        # Zero out rows past the end of the image's row range; this also zeroes
        # "phantom" chunks of a core whose chunk range over-covers total_chunks
        # (their block index is clamped in the index_map, contents masked here).
        row_start = (k * cpc + c) * tr
        valid = rows - row_start
        rid = lax.broadcasted_iota(jnp.int32, (tr, lane), 0)
        keep = rid < valid
        rec = jnp.where(keep, rec, 0.0)
        chg = jnp.where(keep, chg, 0.0)

    # Fold (tr, lane) -> (acc_r, lane): pure VALU vreg adds (no cross-lane
    # reduce, no SMEM round trip).  Final reduce + divides happen in the wrapper.
    acc_ref[0, 0, :, :] += rec.reshape(tr // acc_r, acc_r, lane).sum(axis=0)
    acc_ref[0, 1, :, :] += chg.reshape(tr // acc_r, acc_r, lane).sum(axis=0)


# ---------------------------------------------------------------------------
# Wrapper
# ---------------------------------------------------------------------------
def _hear_loss_impl(Y_hat, X, Y, z_id_X, z_id_Y, same, *,
                    target_tile_bytes=_TARGET_TILE_BYTES):
    B, C, H, W = X.shape
    n = C * H * W
    lane, rows, needs_pad = _choose_lane(C, H, W)

    yhat_p = _prep(Y_hat, B, n, lane, rows, needs_pad)
    x_p = _prep(X, B, n, lane, rows, needs_pad)
    y_p = _prep(Y, B, n, lane, rows, needs_pad)
    same_f = jnp.reshape(same, (B,)).astype(jnp.float32)   # accepts (B,) or (B,1)

    # ---- tiling (all static / trace-time) --------------------------------
    itemsize = max(jnp.dtype(a.dtype).itemsize for a in (Y_hat, X, Y))
    tr_cap = max(8, (target_tile_bytes // (lane * itemsize)) // 8 * 8)
    tr = rows if rows <= tr_cap else tr_cap
    total_chunks = pl.cdiv(rows, tr)

    ncores = max(1, min(_num_tensorcores(), total_chunks))
    cpc = pl.cdiv(total_chunks, ncores)          # chunks per core
    last_blk = total_chunks - 1
    mask_rows = (tr * total_chunks != rows) or (cpc * ncores != total_chunks)

    # Accumulator sublane depth: largest divisor of tr that is <= 8.
    acc_r = next(d for d in (8, 7, 6, 5, 4, 3, 2, 1) if tr % d == 0)

    img_spec = pl.BlockSpec(
        (1, tr, lane),
        # Clamp so the DMA start always stays in range; phantom chunks simply
        # re-read the last block and are masked to zero in the kernel.
        lambda k, b, c: (b, jnp.minimum(k * cpc + c, last_blk), 0))
    out_spec = pl.BlockSpec((1, 2, acc_r, lane), lambda k, b, c: (k, 0, 0, 0))

    kernel = functools.partial(
        _hear_loss_kernel, tr=tr, acc_r=acc_r, lane=lane,
        cpc=cpc, rows=rows, mask_rows=mask_rows)

    partials = pl.pallas_call(
        kernel,
        out_shape=jax.ShapeDtypeStruct((ncores, 2, acc_r, lane), jnp.float32),
        grid_spec=pltpu.PrefetchScalarGridSpec(
            num_scalar_prefetch=0,
            grid=(ncores, B, cpc),
            in_specs=[
                pl.BlockSpec(memory_space=pltpu.SMEM),  # same: whole (B,) in SMEM
                img_spec,   # Y_hat
                img_spec,   # X
                img_spec,   # Y
            ],
            out_specs=out_spec,
        ),
        compiler_params=pltpu.CompilerParams(
            # NOTE(v7x): if an xprof trace shows the size-`ncores` axis not
            # landing on both TensorCores, switch it to pltpu.CORE_PARALLEL —
            # the per-core output blocks are already disjoint, so that is safe.
            dimension_semantics=("parallel", "arbitrary", "arbitrary"),
            vmem_limit_bytes=_VMEM_LIMIT_BYTES),
    )(same_f, yhat_p, x_p, y_p)

    # Single cross-lane reduction + normalization, once, outside the loop.
    n_img = float(B * n)
    rec = 0.5 * jnp.sum(partials[:, 0]) / n_img
    chg = jnp.sum(partials[:, 1]) / n_img

    # id_loss is O(B*D) total work; as a fused XLA op it is essentially free
    # and avoids lane-sparse per-step DMA descriptors in the kernel.
    inner = jnp.sum(z_id_X.astype(jnp.float32) * z_id_Y.astype(jnp.float32),
                    axis=-1)
    idl = jnp.mean(jnp.abs(1.0 - inner))

    total = rec + idl + chg
    return total, rec, idl, chg


hear_loss = jax.jit(_hear_loss_impl, static_argnames=("target_tile_bytes",))


# ---------------------------------------------------------------------------
# Pure-JAX reference mirroring the PyTorch module
# ---------------------------------------------------------------------------
def hear_loss_ref(Y_hat, X, Y, z_id_X, z_id_Y, same):
    s = jnp.broadcast_to(jnp.reshape(same, (X.shape[0], 1))[:, :, None, None],
                         X.shape)
    rec = 0.5 * jnp.mean((X * s - Y * s) ** 2)
    inner = jnp.sum(z_id_X * z_id_Y, axis=-1)
    idl = jnp.mean(jnp.abs(1.0 - inner))
    chg = jnp.mean(jnp.abs(Y_hat - Y))
    return rec + idl + chg, rec, idl, chg


if __name__ == "__main__":
    def _check(out, ref):
        for got, want in zip(out, ref):
            g, w = float(got), float(want)
            assert abs(g - w) <= 1e-4 * (1.0 + abs(w)), (g, w)

    D = 32  # config.z_id_size

    # --- Test 1: module-sized shapes; single-chunk, pad-free fast path -----
    B, C, H, W = 2, 4, 16, 16
    k = jax.random.split(jax.random.PRNGKey(0), 6)
    Y_hat = jax.random.normal(k[0], (B, C, H, W), jnp.float32)
    X = jax.random.normal(k[1], (B, C, H, W), jnp.float32)
    Y = jax.random.normal(k[2], (B, C, H, W), jnp.float32)
    z_id_X = jax.random.normal(k[3], (B, D), jnp.float32)
    z_id_X = z_id_X / jnp.linalg.norm(z_id_X, axis=-1, keepdims=True)
    z_id_Y = jax.random.normal(k[4], (B, D), jnp.float32)
    z_id_Y = z_id_Y / jnp.linalg.norm(z_id_Y, axis=-1, keepdims=True)
    same = jax.random.bernoulli(k[5], 0.5, (B, 1)).astype(jnp.float32)

    out = jax.block_until_ready(hear_loss(Y_hat, X, Y, z_id_X, z_id_Y, same))
    _check(out, hear_loss_ref(Y_hat, X, Y, z_id_X, z_id_Y, same))

    # --- Test 2: multi-chunk path with a ragged row tail (in-kernel mask) --
    # Small tile budget so the masked / multi-chunk path is exercised cheaply.
    B2, C2, H2, W2 = 2, 3, 20, 128
    k2 = jax.random.split(jax.random.PRNGKey(1), 6)
    Y_hat2 = jax.random.normal(k2[0], (B2, C2, H2, W2), jnp.float32)
    X2 = jax.random.normal(k2[1], (B2, C2, H2, W2), jnp.float32)
    Y2 = jax.random.normal(k2[2], (B2, C2, H2, W2), jnp.float32)
    z_id_X2 = jax.random.normal(k2[3], (B2, D), jnp.float32)
    z_id_Y2 = jax.random.normal(k2[4], (B2, D), jnp.float32)
    same2 = jax.random.bernoulli(k2[5], 0.5, (B2,)).astype(jnp.float32)

    out2 = jax.block_until_ready(
        hear_loss(Y_hat2, X2, Y2, z_id_X2, z_id_Y2, same2,
                  target_tile_bytes=16 * 1024))
    _check(out2, hear_loss_ref(Y_hat2, X2, Y2, z_id_X2, z_id_Y2, same2))

    print("KERNEL_OK")
</pallas_src>

<mosaic_0001>
module attributes {stable_mosaic.version = 11 : i64} {
  func.func @_hear_loss_kernel(%arg0: i32, %arg1: i32, %arg2: i32, %arg3: memref<2xf32, #tpu.memory_space<smem>>, %arg4: memref<1x1x1024xf32, #tpu.memory_space<vmem>>, %arg5: memref<1x1x1024xf32, #tpu.memory_space<vmem>>, %arg6: memref<1x1x1024xf32, #tpu.memory_space<vmem>>, %arg7: memref<1x2x1x1024xf32, #tpu.memory_space<vmem>>) attributes {dimension_semantics = [#tpu.dimension_semantics<parallel>, #tpu.dimension_semantics<arbitrary>, #tpu.dimension_semantics<arbitrary>], iteration_bounds = array<i64: 1, 2, 1>, scalar_prefetch = 0 : i64, scratch_operands = 0 : i64, tpu.core_type = #tpu.core_type<tc>, window_params = [{transform_indices = @transform_0, window_bounds = array<i64: 2>}, {transform_indices = @transform_1, window_bounds = array<i64: 1, 1, 1024>}, {transform_indices = @transform_2, window_bounds = array<i64: 1, 1, 1024>}, {transform_indices = @transform_3, window_bounds = array<i64: 1, 1, 1024>}, {transform_indices = @transform_4, window_bounds = array<i64: 1, 2, 1, 1024>}]} {
    %c0_i32 = arith.constant 0 : i32
    %0 = arith.cmpi eq, %arg1, %c0_i32 : i32
    %c0_i32_0 = arith.constant 0 : i32
    %1 = arith.cmpi eq, %arg2, %c0_i32_0 : i32
    %2 = arith.andi %0, %1 : i1
    %3 = arith.extui %2 : i1 to i32
    %c0_i32_1 = arith.constant 0 : i32
    %4 = arith.cmpi ne, %3, %c0_i32_1 : i32
    scf.if %4 {
      %cst_26 = arith.constant 0.000000e+00 : f32
      %36 = vector.broadcast %cst_26 : f32 to vector<1x2x1x1024xf32>
      %c0_27 = arith.constant 0 : index
      %c0_28 = arith.constant 0 : index
      %c0_29 = arith.constant 0 : index
      %c0_30 = arith.constant 0 : index
      %37 = vector.load %arg7[%c0_27, %c0_28, %c0_29, %c0_30] : memref<1x2x1x1024xf32, #tpu.memory_space<vmem>>, vector<1x2x1x1024xf32>
      tpu.vector_store %arg7[%c0_27, %c0_28, %c0_29, %c0_30], %36 {strides = array<i32>} : memref<1x2x1x1024xf32, #tpu.memory_space<vmem>>, vector<1x2x1x1024xf32>,
    } else {
    }
    %5 = arith.index_cast %arg1 : i32 to index
    %6 = memref.load %arg3[%5] : memref<2xf32, #tpu.memory_space<smem>>
    %7 = arith.mulf %6, %6 : f32
    %c0 = arith.constant 0 : index
    %c0_2 = arith.constant 0 : index
    %c0_3 = arith.constant 0 : index
    %8 = vector.load %arg5[%c0, %c0_2, %c0_3] : memref<1x1x1024xf32, #tpu.memory_space<vmem>>, vector<1x1x1024xf32>
    %9 = vector.shape_cast %8 : vector<1x1x1024xf32> to vector<1x1024xf32>
    %c0_4 = arith.constant 0 : index
    %c0_5 = arith.constant 0 : index
    %c0_6 = arith.constant 0 : index
    %10 = vector.load %arg6[%c0_4, %c0_5, %c0_6] : memref<1x1x1024xf32, #tpu.memory_space<vmem>>, vector<1x1x1024xf32>
    %11 = vector.shape_cast %10 : vector<1x1x1024xf32> to vector<1x1024xf32>
    %c0_7 = arith.constant 0 : index
    %c0_8 = arith.constant 0 : index
    %c0_9 = arith.constant 0 : index
    %12 = vector.load %arg4[%c0_7, %c0_8, %c0_9] : memref<1x1x1024xf32, #tpu.memory_space<vmem>>, vector<1x1x1024xf32>
    %13 = vector.shape_cast %12 : vector<1x1x1024xf32> to vector<1x1024xf32>
    %14 = arith.subf %9, %11 : vector<1x1024xf32>
    %15 = arith.mulf %14, %14 : vector<1x1024xf32>
    %16 = vector.broadcast %7 : f32 to vector<1x1024xf32>
    %17 = arith.mulf %16, %15 : vector<1x1024xf32>
    %18 = arith.subf %13, %11 : vector<1x1024xf32>
    %19 = math.absf %18 : vector<1x1024xf32>
    %c0_10 = arith.constant 0 : index
    %c0_11 = arith.constant 0 : index
    %c0_12 = arith.constant 0 : index
    %c0_13 = arith.constant 0 : index
    %20 = vector.load %arg7[%c0_10, %c0_11, %c0_12, %c0_13] : memref<1x2x1x1024xf32, #tpu.memory_space<vmem>>, vector<1x1x1x1024xf32>
    %21 = vector.shape_cast %20 : vector<1x1x1x1024xf32> to vector<1x1024xf32>
    %22 = vector.shape_cast %17 : vector<1x1024xf32> to vector<1x1x1024xf32>
    %cst = arith.constant dense<0.000000e+00> : vector<1x1024xf32>
    %23 = vector.multi_reduction <add>, %22, %cst [0] : vector<1x1x1024xf32> to vector<1x1024xf32>
    %24 = arith.addf %21, %23 : vector<1x1024xf32>
    %c0_14 = arith.constant 0 : index
    %c0_15 = arith.constant 0 : index
    %c0_16 = arith.constant 0 : index
    %c0_17 = arith.constant 0 : index
    %25 = vector.load %arg7[%c0_14, %c0_15, %c0_16, %c0_17] : memref<1x2x1x1024xf32, #tpu.memory_space<vmem>>, vector<1x1x1x1024xf32>
    %26 = vector.shape_cast %25 : vector<1x1x1x1024xf32> to vector<1x1024xf32>
    %27 = vector.shape_cast %24 : vector<1x1024xf32> to vector<1x1x1x1024xf32>
    tpu.vector_store %arg7[%c0_14, %c0_15, %c0_16, %c0_17], %27 {strides = array<i32>} : memref<1x2x1x1024xf32, #tpu.memory_space<vmem>>, vector<1x1x1x1024xf32>,
    %c0_18 = arith.constant 0 : index
    %c1 = arith.constant 1 : index
    %c0_19 = arith.constant 0 : index
    %c0_20 = arith.constant 0 : index
    %28 = vector.load %arg7[%c0_18, %c1, %c0_19, %c0_20] : memref<1x2x1x1024xf32, #tpu.memory_space<vmem>>, vector<1x1x1x1024xf32>
    %29 = vector.shape_cast %28 : vector<1x1x1x1024xf32> to vector<1x1024xf32>
    %30 = vector.shape_cast %19 : vector<1x1024xf32> to vector<1x1x1024xf32>
    %cst_21 = arith.constant dense<0.000000e+00> : vector<1x1024xf32>
    %31 = vector.multi_reduction <add>, %30, %cst_21 [0] : vector<1x1x1024xf32> to vector<1x1024xf32>
    %32 = arith.addf %29, %31 : vector<1x1024xf32>
    %c0_22 = arith.constant 0 : index
    %c1_23 = arith.constant 1 : index
    %c0_24 = arith.constant 0 : index
    %c0_25 = arith.constant 0 : index
    %33 = vector.load %arg7[%c0_22, %c1_23, %c0_24, %c0_25] : memref<1x2x1x1024xf32, #tpu.memory_space<vmem>>, vector<1x1x1x1024xf32>
    %34 = vector.shape_cast %33 : vector<1x1x1x1024xf32> to vector<1x1024xf32>
    %35 = vector.shape_cast %32 : vector<1x1024xf32> to vector<1x1x1x1024xf32>
    tpu.vector_store %arg7[%c0_22, %c1_23, %c0_24, %c0_25], %35 {strides = array<i32>} : memref<1x2x1x1024xf32, #tpu.memory_space<vmem>>, vector<1x1x1x1024xf32>,
    return
  }
  func.func @transform_0(%arg0: i32, %arg1: i32, %arg2: i32) -> i32 {
    %c0_i32 = arith.constant 0 : i32
    %c0_i32_0 = arith.constant 0 : i32
    return %c0_i32 : i32
  }
  func.func @transform_1(%arg0: i32, %arg1: i32, %arg2: i32) -> (i32, i32, i32) {
    %c1_i32 = arith.constant 1 : i32
    %0 = arith.muli %arg0, %c1_i32 : i32
    %1 = arith.addi %0, %arg2 : i32
    %c0_i32 = arith.constant 0 : i32
    %2 = arith.minsi %1, %c0_i32 : i32
    %c0_i32_0 = arith.constant 0 : i32
    %c0_i32_1 = arith.constant 0 : i32
    return %arg1, %2, %c0_i32_0 : i32, i32, i32
  }
  func.func @transform_2(%arg0: i32, %arg1: i32, %arg2: i32) -> (i32, i32, i32) {
    %c1_i32 = arith.constant 1 : i32
    %0 = arith.muli %arg0, %c1_i32 : i32
    %1 = arith.addi %0, %arg2 : i32
    %c0_i32 = arith.constant 0 : i32
    %2 = arith.minsi %1, %c0_i32 : i32
    %c0_i32_0 = arith.constant 0 : i32
    %c0_i32_1 = arith.constant 0 : i32
    return %arg1, %2, %c0_i32_0 : i32, i32, i32
  }
  func.func @transform_3(%arg0: i32, %arg1: i32, %arg2: i32) -> (i32, i32, i32) {
    %c1_i32 = arith.constant 1 : i32
    %0 = arith.muli %arg0, %c1_i32 : i32
    %1 = arith.addi %0, %arg2 : i32
    %c0_i32 = arith.constant 0 : i32
    %2 = arith.minsi %1, %c0_i32 : i32
    %c0_i32_0 = arith.constant 0 : i32
    %c0_i32_1 = arith.constant 0 : i32
    return %arg1, %2, %c0_i32_0 : i32, i32, i32
  }
  func.func @transform_4(%arg0: i32, %arg1: i32, %arg2: i32) -> (i32, i32, i32, i32) {
    %c0_i32 = arith.constant 0 : i32
    %c0_i32_0 = arith.constant 0 : i32
    %c0_i32_1 = arith.constant 0 : i32
    %c0_i32_2 = arith.constant 0 : i32
    return %arg0, %c0_i32, %c0_i32_0, %c0_i32_1 : i32, i32, i32, i32
  }
}

</mosaic_0001>

<llo_original>
// kernel: _hear_loss_impl.1
$region0: #{_hear_loss_impl.1}
  #allocation0 [shape = 'u32[]', space=smem, size = 0x4, offset = 0x4, fixed_abs, tag = 'smem constant byte address 0x4 - core index']
  #allocation1 [shape = 'u32[144,128]{1,0:T(1,128)}', space=vmem, size = 0x12000, scoped, tag = 'internal scratch']
  %s0 = inlined_call_operand.vmem [shape: f32[2], index: 0, kind: input, shape index: {}]
  %s1 = inlined_call_operand.vmem [shape: f32[2,1,1024], index: 1, kind: input, shape index: {}]
  %s2 = inlined_call_operand.vmem [shape: f32[2,1,1024], index: 2, kind: input, shape index: {}]
  %s3 = inlined_call_operand.vmem [shape: f32[2,1,1024], index: 3, kind: input, shape index: {}]
  %s4 = inlined_call_operand.vmem [shape: f32[1,2,1,1024], index: 4, kind: output, shape index: {}]
  %s5 = sld [smem:[#allocation0]]
  $region57: #{_hear_loss_impl.1} parent=0
    _
  %s7 = ssub.s32 1, %s5
  %s8 = scalar_select 0, %s7, %s5
  $region1: #{_hear_loss_impl.1} parent=0
    #allocation2 [shape = 'u8[512]{0}', space=smem, size = 0x200, scoped, tag = 'input window, operand 0, single buffered']
    #allocation3 [shape = 's32[2]{0}', space=sflag, size = 0x8, scoped, tag = 'scoped memory for _hear_loss_impl.1']
    %9 = vsyncpa [#allocation3], 0
    loop: start=0, step=1, limit=4
    $region2: #{_hear_loss_impl.1} parent=1 // loop_pre_header
      _
    $region3: #{_hear_loss_impl.1} parent=1 // loop_header
      %s11 = sphi 0, %s15
      %p12 = scmp.ge.s32.totalorder %s11, 4
      %s18 = sphi 0, %s37
      %s19 = sphi 0, %s33
      %s20 = sphi 0, %s29
      %s21 = sphi 0, %s18
      %s22 = sphi 0, %s19
      %s23 = sphi 0, %s20
      %s24 = sphi 0, %s21
      %s25 = sphi 0, %s22
      %s26 = sphi 0, %s23
      %s38 = sphi 0, %s38
      %s40 = sphi 0, %s38
      %s41 = sphi 0, %s40
      %s55 = sphi 0, %s41
      %s69 = sphi 0, %s71
      %s72 = sphi 0, %s69
      %s73 = sphi 0, %s72
      %s89 = sphi 0, %s73
      %s103 = sphi 0, %s105
      %s106 = sphi 0, %s103
      %s107 = sphi 0, %s106
      %s123 = sphi 0, %s107
      %s137 = sphi 0, %s139
      %s140 = sphi 0, %s137
      %s141 = sphi 0, %s140
      %s157 = sphi 0, %s141
      %s163 = sphi 0, %s165
      %s166 = sphi 0, %s163
      %s167 = sphi 0, %s166
      %s183 = sphi 0, %s167
    $region4: #{_hear_loss_impl.1} parent=1 // loop_header_branch
      %14 = sbr.rel (%p12) target = $region8
    $region5: #{_hear_loss_impl.1} parent=1 // loop_body
      %s16 = ssub.s32 %s11, 1
      %s17 = ssub.s32 %s11, 2
      %s27 = sadd.s32 1, %s20
      %p28 = scmp.ge.s32.totalorder %s27, 1
      %s29 = scalar_select %p28, 0, %s27
      %s30 = sadd.s32 1, %s19
      %s31 = scalar_select %p28, %s30, %s19
      %p32 = scmp.ge.s32.totalorder %s31, 2
      %s33 = scalar_select %p32, 0, %s31
      %s34 = sadd.s32 1, %s18
      %s35 = scalar_select %p32, %s34, %s18
      %p36 = scmp.ge.s32.totalorder %s35, 1
      %s37 = scalar_select %p36, 0, %s35
      %s39 = sadd.s32 %s38, 1
      %p42 = scmp.eq.s32.totalorder %s11, 1
      %p43 = scmp.ne.s32.totalorder %s38, %s40
      %p44 = scmp.eq.s32.totalorder %s11, 0
      %p45 = por %p43, %p44
      %p46 = scmp.ne.s32.totalorder %s38, %s40
      %p47 = scmp.eq.s32.totalorder %s16, 1
      %p48 = por %p46, %p47
      %p49 = scmp.ne.s32.totalorder %s40, %s41
      %p50 = scmp.eq.s32.totalorder %s16, 0
      %p51 = por %p49, %p50
      %p52 = scmp.ne.s32.totalorder %s40, %s41
      %p53 = scmp.eq.s32.totalorder %s17, 1
      %p54 = por %p52, %p53
      %p56 = scmp.ne.s32.totalorder %s41, %s55
      %p57 = scmp.eq.s32.totalorder %s17, 0
      %p58 = por %p56, %p57
      %s59 = sadd.s32 %s18, %s20
      %p60 = scmp.lt.s32.totalorder %s59, 0
      %s61 = scalar_select %p60, %s59, 0
      %s62 = sadd.s32 %s37, %s29
      %p63 = scmp.lt.s32.totalorder %s62, 0
      %s64 = scalar_select %p63, %s62, 0
      %s65 = ssub.s32 %s19, %s33
      %s66 = ssub.s32 %s61, %s64
      %s67 = sor.u32 %s65, %s66
      %p68 = scmp.eq.s32.totalorder %s67, 0
      %s70 = sadd.s32 %s69, 1
      %s71 = scalar_select %p68, %s69, %s70
      %p74 = pneg %p68
      %p75 = scmp.eq.s32.totalorder %s11, 1
      %p76 = por %p74, %p75
      %p77 = scmp.ne.s32.totalorder %s69, %s72
      %p78 = scmp.eq.s32.totalorder %s11, 0
      %p79 = por %p77, %p78
      %p80 = scmp.ne.s32.totalorder %s69, %s72
      %p81 = scmp.eq.s32.totalorder %s16, 1
      %p82 = por %p80, %p81
      %p83 = scmp.ne.s32.totalorder %s72, %s73
      %p84 = scmp.eq.s32.totalorder %s16, 0
      %p85 = por %p83, %p84
      %p86 = scmp.ne.s32.totalorder %s72, %s73
      %p87 = scmp.eq.s32.totalorder %s17, 1
      %p88 = por %p86, %p87
      %p90 = scmp.ne.s32.totalorder %s73, %s89
      %p91 = scmp.eq.s32.totalorder %s17, 0
      %p92 = por %p90, %p91
      %s93 = sadd.s32 %s18, %s20
      %p94 = scmp.lt.s32.totalorder %s93, 0
      %s95 = scalar_select %p94, %s93, 0
      %s96 = sadd.s32 %s37, %s29
      %p97 = scmp.lt.s32.totalorder %s96, 0
      %s98 = scalar_select %p97, %s96, 0
      %s99 = ssub.s32 %s19, %s33
      %s100 = ssub.s32 %s95, %s98
      %s101 = sor.u32 %s99, %s100
      %p102 = scmp.eq.s32.totalorder %s101, 0
      %s104 = sadd.s32 %s103, 1
      %s105 = scalar_select %p102, %s103, %s104
      %p108 = pneg %p102
      %p109 = scmp.eq.s32.totalorder %s11, 1
      %p110 = por %p108, %p109
      %p111 = scmp.ne.s32.totalorder %s103, %s106
      %p112 = scmp.eq.s32.totalorder %s11, 0
      %p113 = por %p111, %p112
      %p114 = scmp.ne.s32.totalorder %s103, %s106
      %p115 = scmp.eq.s32.totalorder %s16, 1
      %p116 = por %p114, %p115
      %p117 = scmp.ne.s32.totalorder %s106, %s107
      %p118 = scmp.eq.s32.totalorder %s16, 0
      %p119 = por %p117, %p118
      %p120 = scmp.ne.s32.totalorder %s106, %s107
      %p121 = scmp.eq.s32.totalorder %s17, 1
      %p122 = por %p120, %p121
      %p124 = scmp.ne.s32.totalorder %s107, %s123
      %p125 = scmp.eq.s32.totalorder %s17, 0
      %p126 = por %p124, %p125
      %s127 = sadd.s32 %s18, %s20
      %p128 = scmp.lt.s32.totalorder %s127, 0
      %s129 = scalar_select %p128, %s127, 0
      %s130 = sadd.s32 %s37, %s29
      %p131 = scmp.lt.s32.totalorder %s130, 0
      %s132 = scalar_select %p131, %s130, 0
      %s133 = ssub.s32 %s19, %s33
      %s134 = ssub.s32 %s129, %s132
      %s135 = sor.u32 %s133, %s134
      %p136 = scmp.eq.s32.totalorder %s135, 0
      %s138 = sadd.s32 %s137, 1
      %s139 = scalar_select %p136, %s137, %s138
      %p142 = pneg %p136
      %p143 = scmp.eq.s32.totalorder %s11, 1
      %p144 = por %p142, %p143
      %p145 = scmp.ne.s32.totalorder %s137, %s140
      %p146 = scmp.eq.s32.totalorder %s11, 0
      %p147 = por %p145, %p146
      %p148 = scmp.ne.s32.totalorder %s137, %s140
      %p149 = scmp.eq.s32.totalorder %s16, 1
      %p150 = por %p148, %p149
      %p151 = scmp.ne.s32.totalorder %s140, %s141
      %p152 = scmp.eq.s32.totalorder %s16, 0
      %p153 = por %p151, %p152
      %p154 = scmp.ne.s32.totalorder %s140, %s141
      %p155 = scmp.eq.s32.totalorder %s17, 1
      %p156 = por %p154, %p155
      %p158 = scmp.ne.s32.totalorder %s141, %s157
      %p159 = scmp.eq.s32.totalorder %s17, 0
      %p160 = por %p158, %p159
      %s161 = ssub.s32 %s18, %s37
      %p162 = scmp.eq.s32.totalorder %s161, 0
      %s164 = sadd.s32 %s163, 1
      %s165 = scalar_select %p162, %s163, %s164
      %p168 = pneg %p162
      %p169 = scmp.eq.s32.totalorder %s11, 1
      %p170 = por %p168, %p169
      %p171 = scmp.ne.s32.totalorder %s163, %s166
      %p172 = scmp.eq.s32.totalorder %s11, 0
      %p173 = por %p171, %p172
      %p174 = scmp.ne.s32.totalorder %s163, %s166
      %p175 = scmp.eq.s32.totalorder %s16, 1
      %p176 = por %p174, %p175
      %p177 = scmp.ne.s32.totalorder %s166, %s167
      %p178 = scmp.eq.s32.totalorder %s16, 0
      %p179 = por %p177, %p178
      %p180 = scmp.ne.s32.totalorder %s166, %s167
      %p181 = scmp.eq.s32.totalorder %s17, 1
      %p182 = por %p180, %p181
      %p184 = scmp.ne.s32.totalorder %s167, %s183
      %p185 = scmp.eq.s32.totalorder %s17, 0
      %p186 = por %p184, %p185
      %p187 = scmp.le.s32.totalorder 1, %s11
      %p188 = scmp.lt.s32.totalorder %s11, 3
      %p189 = pnand %p187, %p188
      %p190 = pneg %p189
      // Predicated region
      $region9: #{_hear_loss_impl.1} parent=5 // pred_check
        _
      $region10: #{_hear_loss_impl.1} parent=5 // pred_check_branch
        %192 = sbr.rel (%p189) target = $region12
      $region11: #{_hear_loss_impl.1} parent=5 // pred_region
        %s193 = ssub.s32 %s11, 1
        // Predicated region
        $region13: #{_hear_loss_impl.1} parent=11 // pred_check
          %p194 = pneg %p51
        $region14: #{_hear_loss_impl.1} parent=11 // pred_check_branch
          %196 = sbr.rel (%p194) target = $region16
        $region15: #{_hear_loss_impl.1} parent=11 // pred_region
          %s198 = ssub.s32 16, 16
          %199 = vsyncadd [#allocation3], %s198
          %s201 = sshll.u32 %s0, 4
          %s202 = int_to_ptr.vmem [resolvable:$true] %s201
          %204 = dma.vmem_to_smem %s202, 16, [#allocation2], [#allocation3]
        $region16: #{_hear_loss_impl.1} parent=11 // pred_fallthru
          _
      $region12: #{_hear_loss_impl.1} parent=5 // pred_fallthru
        _
      %p205 = scmp.lt.s32.totalorder %s11, 2
      // Predicated region
      $region17: #{_hear_loss_impl.1} parent=5 // pred_check
        %p206 = pneg %p205
      $region18: #{_hear_loss_impl.1} parent=5 // pred_check_branch
        %208 = sbr.rel (%p206) target = $region20
      $region19: #{_hear_loss_impl.1} parent=5 // pred_region
        // Predicated region
        $region21: #{_hear_loss_impl.1} parent=19 // pred_check
          %p209 = pneg %p79
        $region22: #{_hear_loss_impl.1} parent=19 // pred_check_branch
          %211 = sbr.rel (%p209) target = $region24
        $region23: #{_hear_loss_impl.1} parent=19 // pred_region
          %s212 = sadd.s32 %s18, %s20
          %p213 = scmp.lt.s32.totalorder %s212, 0
          %s214 = scalar_select %p213, %s212, 0
          %p215 = scmp.lt.s32.totalorder %s19, 1
          %s216 = scalar_select %p215, %s19, 1
          %p217 = scmp.lt.s32.totalorder %s214, 0
          %s218 = scalar_select %p217, %s214, 0
          %s219 = smul.addr %s218, 8
          %s220 = smul.addr %s216, 8
          %s221 = sadd.s32 %s219, %s220
          %s222 = scalar_lea.vmem %s1, %s221
          %s223 = sadd.s32 %s18, %s20
          %p224 = scmp.lt.s32.totalorder %s223, 0
          %s225 = scalar_select %p224, %s223, 0
        $region24: #{_hear_loss_impl.1} parent=19 // pred_fallthru
          _
        // Predicated region
        $region25: #{_hear_loss_impl.1} parent=19 // pred_check
          %p226 = pneg %p113
        $region26: #{_hear_loss_impl.1} parent=19 // pred_check_branch
          %228 = sbr.rel (%p226) target = $region28
        $region27: #{_hear_loss_impl.1} parent=19 // pred_region
          %s229 = sadd.s32 %s18, %s20
          %p230 = scmp.lt.s32.totalorder %s229, 0
          %s231 = scalar_select %p230, %s229, 0
          %p232 = scmp.lt.s32.totalorder %s19, 1
          %s233 = scalar_select %p232, %s19, 1
          %p234 = scmp.lt.s32.totalorder %s231, 0
          %s235 = scalar_select %p234, %s231, 0
          %s236 = smul.addr %s235, 8
          %s237 = smul.addr %s233, 8
          %s238 = sadd.s32 %s236, %s237
          %s239 = scalar_lea.vmem %s2, %s238
          %s240 = sadd.s32 %s18, %s20
          %p241 = scmp.lt.s32.totalorder %s240, 0
          %s242 = scalar_select %p241, %s240, 0
        $region28: #{_hear_loss_impl.1} parent=19 // pred_fallthru
          _
        // Predicated region
        $region29: #{_hear_loss_impl.1} parent=19 // pred_check
          %p243 = pneg %p147
        $region30: #{_hear_loss_impl.1} parent=19 // pred_check_branch
          %245 = sbr.rel (%p243) target = $region32
        $region31: #{_hear_loss_impl.1} parent=19 // pred_region
          %s246 = sadd.s32 %s18, %s20
          %p247 = scmp.lt.s32.totalorder %s246, 0
          %s248 = scalar_select %p247, %s246, 0
          %p249 = scmp.lt.s32.totalorder %s19, 1
          %s250 = scalar_select %p249, %s19, 1
          %p251 = scmp.lt.s32.totalorder %s248, 0
          %s252 = scalar_select %p251, %s248, 0
          %s253 = smul.addr %s252, 8
          %s254 = smul.addr %s250, 8
          %s255 = sadd.s32 %s253, %s254
          %s256 = scalar_lea.vmem %s3, %s255
          %s257 = sadd.s32 %s18, %s20
          %p258 = scmp.lt.s32.totalorder %s257, 0
          %s259 = scalar_select %p258, %s257, 0
        $region32: #{_hear_loss_impl.1} parent=19 // pred_fallthru
          _
      $region20: #{_hear_loss_impl.1} parent=5 // pred_fallthru
        _
      %p260 = scmp.le.s32.totalorder 1, %s11
      %p261 = scmp.lt.s32.totalorder %s11, 3
      %p262 = pnand %p260, %p261
      %p263 = pneg %p262
      // Predicated region
      $region33: #{_hear_loss_impl.1} parent=5 // pred_check
        _
      $region34: #{_hear_loss_impl.1} parent=5 // pred_check_branch
        %265 = sbr.rel (%p262) target = $region36
      $region35: #{_hear_loss_impl.1} parent=5 // pred_region
        %s266 = ssub.s32 %s11, 1
        // Predicated region
        $region37: #{_hear_loss_impl.1} parent=35 // pred_check
          %p267 = pneg %p51
        $region38: #{_hear_loss_impl.1} parent=35 // pred_check_branch
          %269 = sbr.rel (%p267) target = $region40
        $region39: #{_hear_loss_impl.1} parent=35 // pred_region
          %270 = dma.done [#allocation3], 16
        $region40: #{_hear_loss_impl.1} parent=35 // pred_fallthru
          _
        %271 = sfence
        %p272 = pneg %p51
        %p273 = pneg %p48
        %s274 = sadd.s32 %s21, %s23
        %p275 = scmp.lt.s32.totalorder %s274, 0
        %s276 = scalar_select %p275, %s274, 0
        %p277 = scmp.lt.s32.totalorder %s22, 1
        %s278 = scalar_select %p277, %s22, 1
        %p279 = scmp.lt.s32.totalorder %s276, 0
        %s280 = scalar_select %p279, %s276, 0
        %s281 = smul.addr %s280, 8
        %s282 = smul.addr %s278, 8
        %s283 = sadd.s32 %s281, %s282
        %s284 = scalar_lea.vmem %s1, %s283
        %p285 = pneg %p85
        %p286 = pneg %p82
        %s287 = sadd.s32 %s21, %s23
        %p288 = scmp.lt.s32.totalorder %s287, 0
        %s289 = scalar_select %p288, %s287, 0
        %p290 = scmp.lt.s32.totalorder %s22, 1
        %s291 = scalar_select %p290, %s22, 1
        %p292 = scmp.lt.s32.totalorder %s289, 0
        %s293 = scalar_select %p292, %s289, 0
        %s294 = smul.addr %s293, 8
        %s295 = smul.addr %s291, 8
        %s296 = sadd.s32 %s294, %s295
        %s297 = scalar_lea.vmem %s2, %s296
        %p298 = pneg %p119
        %p299 = pneg %p116
        %s300 = sadd.s32 %s21, %s23
        %p301 = scmp.lt.s32.totalorder %s300, 0
        %s302 = scalar_select %p301, %s300, 0
        %p303 = scmp.lt.s32.totalorder %s22, 1
        %s304 = scalar_select %p303, %s22, 1
        %p305 = scmp.lt.s32.totalorder %s302, 0
        %s306 = scalar_select %p305, %s302, 0
        %s307 = smul.addr %s306, 8
        %s308 = smul.addr %s304, 8
        %s309 = sadd.s32 %s307, %s308
        %s310 = scalar_lea.vmem %s3, %s309
        %p311 = pneg %p153
        %p312 = pneg %p150
        %p313 = pneg %p179
        %p314 = pneg %p176
        %p315 = scmp.lt.s32.totalorder %s21, 0
        %s316 = scalar_select %p315, %s21, 0
        %s317 = smul.addr %s316, 16
        %s318 = scalar_lea.vmem %s4, %s317
        %s319 = sadd.s32 %s21, %s23
        %p320 = scmp.lt.s32.totalorder %s319, 0
        %s321 = scalar_select %p320, %s319, 0
        %p322 = scmp.lt.s32.totalorder %s22, 1
        %s323 = scalar_select %p322, %s22, 1
        %p324 = scmp.lt.s32.totalorder %s321, 0
        %s325 = scalar_select %p324, %s321, 0
        %s326 = smul.addr %s325, 8
        %s327 = smul.addr %s323, 8
        %s328 = sadd.s32 %s326, %s327
        %s329 = scalar_lea.vmem %s1, %s328
        %s330 = sadd.s32 %s21, %s23
        %p331 = scmp.lt.s32.totalorder %s330, 0
        %s332 = scalar_select %p331, %s330, 0
        %s333 = sadd.s32 %s21, %s23
        %p334 = scmp.lt.s32.totalorder %s333, 0
        %s335 = scalar_select %p334, %s333, 0
        %p336 = scmp.lt.s32.totalorder %s22, 1
        %s337 = scalar_select %p336, %s22, 1
        %p338 = scmp.lt.s32.totalorder %s335, 0
        %s339 = scalar_select %p338, %s335, 0
        %s340 = smul.addr %s339, 8
        %s341 = smul.addr %s337, 8
        %s342 = sadd.s32 %s340, %s341
        %s343 = scalar_lea.vmem %s2, %s342
        %s344 = sadd.s32 %s21, %s23
        %p345 = scmp.lt.s32.totalorder %s344, 0
        %s346 = scalar_select %p345, %s344, 0
        %s347 = sadd.s32 %s21, %s23
        %p348 = scmp.lt.s32.totalorder %s347, 0
        %s349 = scalar_select %p348, %s347, 0
        %p350 = scmp.lt.s32.totalorder %s22, 1
        %s351 = scalar_select %p350, %s22, 1
        %p352 = scmp.lt.s32.totalorder %s349, 0
        %s353 = scalar_select %p352, %s349, 0
        %s354 = smul.addr %s353, 8
        %s355 = smul.addr %s351, 8
        %s356 = sadd.s32 %s354, %s355
        %s357 = scalar_lea.vmem %s3, %s356
        %s358 = sadd.s32 %s21, %s23
        %p359 = scmp.lt.s32.totalorder %s358, 0
        %s360 = scalar_select %p359, %s358, 0
        %p361 = scmp.lt.s32.totalorder %s21, 0
        %s362 = scalar_select %p361, %s21, 0
        %s363 = smul.addr %s362, 16
        %s364 = scalar_lea.vmem %s4, %s363
        %p365 = scmp.eq.s32.totalorder %s22, 0
        %p366 = scmp.eq.s32.totalorder %s23, 0
        %p367 = pnand %p365, %p366
        %p368 = pneg %p367
        // Predicated region
        $region41: #{_hear_loss_impl.1} parent=35 // pred_check
          _
        $region42: #{_hear_loss_impl.1} parent=35 // pred_check_branch
          %370 = sbr.rel (%p367) target = $region44
        $region43: #{_hear_loss_impl.1} parent=35 // pred_region
          %371 = vst [vmem:[%s364] sm:$0xff] 0.0
          %372 = vst [vmem:[%s364 + $0x8] sm:$0xff] 0.0
        $region44: #{_hear_loss_impl.1} parent=35 // pred_fallthru
          _
        %s373 = sld [smem:[#allocation2 + %s22]]
        %s374 = smul.f32 %s373, %s373
        %v375 = vld [vmem:[%s343] sm:$0xff]
        %v376 = vld [vmem:[%s357] sm:$0xff]
        %v377 = vld [vmem:[%s329] sm:$0xff]
        %v378 = vsub.f32 %v375, %v376
        %v379 = vmul.f32 %v378, %v378
        %v380 = vstv %s374
        %v381 = vmul.f32 %v380, %v379
        %v382 = vsub.f32 %v377, %v376
        %v383 = vand.u32 2147483647, %v382
        %v384 = vld [vmem:[%s364] sm:$0xff]
        %v385 = vadd.f32 %v381, 0.0
        %v386 = vadd.f32 %v384, %v385
        %387 = vst [vmem:[%s364] sm:$0xff] %v386
        %s388 = scalar_lea.vmem %s364, 8
        %v389 = vld [vmem:[%s388] sm:$0xff]
        %v390 = vadd.f32 %v383, 0.0
        %v391 = vadd.f32 %v389, %v390
        %392 = vst [vmem:[%s388] sm:$0xff] %v391
        %p393 = scmp.lt.s32.totalorder %s21, 0
        %s394 = scalar_select %p393, %s21, 0
        %s395 = smul.addr %s394, 16
        %s396 = scalar_lea.vmem %s4, %s395
        // Predicated region
        $region45: #{_hear_loss_impl.1} parent=35 // pred_check
          %p397 = pneg %p176
        $region46: #{_hear_loss_impl.1} parent=35 // pred_check_branch
          %399 = sbr.rel (%p397) target = $region48
        $region47: #{_hear_loss_impl.1} parent=35 // pred_region
          _
        $region48: #{_hear_loss_impl.1} parent=35 // pred_fallthru
          _
        // Predicated region
        $region49: #{_hear_loss_impl.1} parent=35 // pred_check
          %p400 = pneg %p176
        $region50: #{_hear_loss_impl.1} parent=35 // pred_check_branch
          %402 = sbr.rel (%p400) target = $region52
        $region51: #{_hear_loss_impl.1} parent=35 // pred_region
          %p403 = scmp.lt.s32.totalorder %s21, 0
          %s404 = scalar_select %p403, %s21, 0
          %s405 = smul.addr %s404, 16
          %s406 = scalar_lea.vmem %s4, %s405
        $region52: #{_hear_loss_impl.1} parent=35 // pred_fallthru
          _
      $region36: #{_hear_loss_impl.1} parent=5 // pred_fallthru
        _
      %p407 = scmp.le.s32.totalorder 2, %s11
      // Predicated region
      $region53: #{_hear_loss_impl.1} parent=5 // pred_check
        %p408 = pneg %p407
      $region54: #{_hear_loss_impl.1} parent=5 // pred_check_branch
        %410 = sbr.rel (%p408) target = $region56
      $region55: #{_hear_loss_impl.1} parent=5 // pred_region
        %s411 = ssub.s32 %s11, 2
      $region56: #{_hear_loss_impl.1} parent=5 // pred_fallthru
        _
    $region6: #{_hear_loss_impl.1} parent=1 // loop_footer
      %s15 = sadd.s32 1, %s11
    $region7: #{_hear_loss_impl.1} parent=1 // loop_footer_branch
      %10 = sbr.rel target = $region3
    $region8: #{_hear_loss_impl.1} parent=1 // loop_exit
      _
    %412 = vsyncpa [#allocation3], 1
    %s413 = scalar_lea.sflag [#allocation3], 1
    %414 = vsyncpa %s413, 1

</llo_original>
